<compile_context>
chip_gen: v7x
topology: tpu7x:2x2x1
jax: 0.10.0
libtpu: 0.0.40
codegen_flags: <defaults>
</compile_context>

<pallas_src>
import math

import jax
import jax.numpy as jnp
from jax.experimental import pallas as pl
from jax.experimental.pallas import tpu as pltpu


def _adaln_kernel(scale1_ref, shift_ref, x_ref, o_ref):
    # scale1_ref : (tR, 1)    per-(batch,channel) row (1 + scale), in x.dtype
    # shift_ref  : (tR, 1)    per-(batch,channel) row shift,       in x.dtype
    # x_ref      : (tR, tHW)  NCHW-native tile (HW on the lane axis)
    # o_ref      : (tR, tHW)
    o_ref[...] = x_ref[...] * scale1_ref[...] + shift_ref[...]


def _target_tile_bytes():
    """Generation-aware tile byte target.

    ~4-6 MiB tiles keep the ~0.35us per-grid-step overhead <10% of the HBM time
    on v5e/v6e/v7x, while the double-buffered footprint (~4x tile) stays inside
    the 32 MiB scoped-VMEM limit we request (v7x physical VMEM is only 64 MiB).
    """
    try:
        vmem = pltpu.get_tpu_info().vmem_capacity_bytes
    except Exception:
        vmem = 128 << 20
    if vmem <= (64 << 20):
        return 4 << 20   # v7x: keep 4x tile well under 32 MiB scoped / 64 MiB phys
    return 6 << 20       # v5e / v6e: 128 MiB physical VMEM


def _pick_tiles(rows, HW, dsize, target_bytes):
    """Pick (tR, tHW) for the flattened (rows=B*C, HW) view.

    Prefers full-HW rows (single contiguous burst per tile, lane-dense stores);
    only splits HW when one 8-row slab of full HW exceeds the budget.
    Tiling rules: second-to-last block dim multiple of 8 or == rows; last block
    dim multiple of 128 or == HW.
    """
    row_bytes = HW * dsize
    if 8 * row_bytes <= target_bytes:
        tHW = HW
        cap = max(8, (target_bytes // row_bytes) // 8 * 8)   # multiple of 8
        tR = rows if cap >= rows else cap
    else:
        tR = rows if rows < 8 else 8
        lanes = max(128, (target_bytes // (tR * dsize)) // 128 * 128)
        tHW = HW if lanes >= HW else lanes
    return tR, tHW


def adaln_forward(x_nchw, emb, weight, bias, *, donate_x=False,
                  tile_target_bytes=None):
    """AdaLN forward.

    x_nchw : (B, C, H, W)   feature map (PyTorch NCHW convention)
    emb    : (B, E)         conditioning embedding
    weight : (2*C, E)       nn.Linear(embed_dim, 2*dim).weight
    bias   : (2*C,)         nn.Linear(embed_dim, 2*dim).bias
    donate_x : if True, alias the output onto x's HBM buffer (only safe when
               the caller does not reuse x afterwards).
    returns: (B, C, H, W)
    """
    B, C, H, W = x_nchw.shape
    HW = H * W
    rows = B * C
    dsize = jnp.dtype(x_nchw.dtype).itemsize

    # ---- Hoisted conditioning path (tiny; fused by XLA, not worth a kernel) ----
    e32 = emb.astype(jnp.float32)
    g = 0.5 * e32 * (1.0 + jax.lax.erf(e32 * (1.0 / math.sqrt(2.0))))  # exact GELU
    y = g @ weight.astype(jnp.float32).T + bias.astype(jnp.float32)    # (B, 2*C)
    # torch.chunk(embedding, 2, -1): FIRST half = shift, SECOND half = scale.
    shift = y[:, :C]
    scale1 = 1.0 + y[:, C:]
    # Cast once to x's dtype (bf16 x stays bf16 end-to-end; see review note).
    shift = shift.astype(x_nchw.dtype).reshape(rows, 1)
    scale1 = scale1.astype(x_nchw.dtype).reshape(rows, 1)

    # ---- NCHW-native streaming kernel over the flattened (B*C, HW) view ----
    x = x_nchw.reshape(rows, HW)

    target = tile_target_bytes if tile_target_bytes is not None else _target_tile_bytes()
    tR, tHW = _pick_tiles(rows, HW, dsize, target)
    grid = (pl.cdiv(rows, tR), pl.cdiv(HW, tHW))

    cost = pl.CostEstimate(
        flops=2 * rows * HW,
        transcendentals=0,
        bytes_accessed=2 * rows * HW * dsize + 2 * rows * dsize,
    )

    out = pl.pallas_call(
        _adaln_kernel,
        out_shape=jax.ShapeDtypeStruct((rows, HW), x_nchw.dtype),
        grid_spec=pltpu.PrefetchScalarGridSpec(
            num_scalar_prefetch=0,
            grid=grid,
            in_specs=[
                pl.BlockSpec((tR, 1), lambda ri, hi: (ri, 0)),      # 1 + scale
                pl.BlockSpec((tR, 1), lambda ri, hi: (ri, 0)),      # shift
                pl.BlockSpec((tR, tHW), lambda ri, hi: (ri, hi)),   # x tile
            ],
            out_specs=pl.BlockSpec((tR, tHW), lambda ri, hi: (ri, hi)),
        ),
        compiler_params=pltpu.CompilerParams(
            # Leading row axis parallel (megacore sharding on v7x); inner HW
            # axis arbitrary so each core streams contiguous rows and the
            # hi-independent scale/shift blocks are revisit-skipped.
            dimension_semantics=("parallel", "arbitrary"),
            # Covers ~4x(4-6 MiB) double-buffered tiles on every generation
            # (v5e default scope is only 16 MiB; v7x physical is 64 MiB).
            vmem_limit_bytes=32 << 20,
        ),
        cost_estimate=cost,
        input_output_aliases=({2: 0} if donate_x else {}),
    )(scale1, shift, x)

    return out.reshape(B, C, H, W)


def adaln_reference(x_nchw, emb, weight, bias):
    """Pure-JAX reference mirroring the PyTorch forward."""
    x = jnp.transpose(x_nchw, (0, 2, 3, 1))                    # NHWC
    g = 0.5 * emb * (1.0 + jax.lax.erf(emb / math.sqrt(2.0)))  # GELU (exact)
    y = g @ weight.T + bias                                    # (B, 2*dim)
    dim = x.shape[-1]
    shift, scale = y[:, :dim], y[:, dim:]
    x = x * (1.0 + scale)[:, None, None, :] + shift[:, None, None, :]
    return jnp.transpose(x, (0, 3, 1, 2))                      # NCHW


if __name__ == "__main__":
    # Small shapes consistent with the module: dim=C=4, embed_dim=32, B=2, 16x16.
    B, C, H, W = 2, 4, 16, 16
    E = 32  # embed_dim (module default is 256; any value is allowed)

    key = jax.random.PRNGKey(0)
    kx, ke, kw, kb = jax.random.split(key, 4)

    x = jax.random.normal(kx, (B, C, H, W), dtype=jnp.float32)
    emb = jax.random.normal(ke, (B, E), dtype=jnp.float32)
    # Synthetic parameters for nn.Linear(E, 2*C): weight (2*C, E), bias (2*C,)
    weight = jax.random.normal(kw, (2 * C, E), dtype=jnp.float32) * 0.05
    bias = jax.random.normal(kb, (2 * C,), dtype=jnp.float32) * 0.05

    out = jax.block_until_ready(adaln_forward(x, emb, weight, bias))
    ref = adaln_reference(x, emb, weight, bias)
    assert out.shape == (B, C, H, W)
    assert jnp.allclose(out, ref, atol=1e-5, rtol=1e-5), "mismatch vs reference (case 1)"

    # Odd shapes: HW=17*17=289 (not a multiple of 128), rows=3*4=12 (not 8-aligned).
    B2, C2, H2, W2 = 3, 4, 17, 17
    x2 = jax.random.normal(kx, (B2, C2, H2, W2), dtype=jnp.float32)
    emb2 = jax.random.normal(ke, (B2, E), dtype=jnp.float32)
    out2 = jax.block_until_ready(adaln_forward(x2, emb2, weight, bias))
    ref2 = adaln_reference(x2, emb2, weight, bias)
    assert jnp.allclose(out2, ref2, atol=1e-5, rtol=1e-5), "mismatch vs reference (case 2)"

    # Same odd shapes with a tiny tile target to force multi-block tiling with
    # partial trailing blocks on both axes (exercises padded reads / masked writes).
    out3 = jax.block_until_ready(
        adaln_forward(x2, emb2, weight, bias, tile_target_bytes=4096))
    assert jnp.allclose(out3, ref2, atol=1e-5, rtol=1e-5), "mismatch vs reference (case 3)"

    print("KERNEL_OK")
</pallas_src>

<mosaic_0001>
module attributes {stable_mosaic.version = 11 : i64} {
  func.func @_adaln_kernel(%arg0: i32, %arg1: i32, %arg2: memref<8x1xf32, #tpu.memory_space<vmem>>, %arg3: memref<8x1xf32, #tpu.memory_space<vmem>>, %arg4: memref<8x256xf32, #tpu.memory_space<vmem>>, %arg5: memref<8x256xf32, #tpu.memory_space<vmem>>) attributes {dimension_semantics = [#tpu.dimension_semantics<parallel>, #tpu.dimension_semantics<arbitrary>], iteration_bounds = array<i64: 1, 1>, scalar_prefetch = 0 : i64, scratch_operands = 0 : i64, tpu.core_type = #tpu.core_type<tc>, window_params = [{transform_indices = @transform_0, window_bounds = array<i64: 8, 1>}, {transform_indices = @transform_1, window_bounds = array<i64: 8, 1>}, {transform_indices = @transform_2, window_bounds = array<i64: 8, 256>}, {transform_indices = @transform_3, window_bounds = array<i64: 8, 256>}]} {
    %c0 = arith.constant 0 : index
    %c0_0 = arith.constant 0 : index
    %0 = vector.load %arg4[%c0, %c0_0] : memref<8x256xf32, #tpu.memory_space<vmem>>, vector<8x256xf32>
    %c0_1 = arith.constant 0 : index
    %c0_2 = arith.constant 0 : index
    %1 = vector.load %arg2[%c0_1, %c0_2] : memref<8x1xf32, #tpu.memory_space<vmem>>, vector<8x1xf32>
    %2 = vector.broadcast %1 : vector<8x1xf32> to vector<8x256xf32>
    %3 = arith.mulf %0, %2 : vector<8x256xf32>
    %c0_3 = arith.constant 0 : index
    %c0_4 = arith.constant 0 : index
    %4 = vector.load %arg3[%c0_3, %c0_4] : memref<8x1xf32, #tpu.memory_space<vmem>>, vector<8x1xf32>
    %5 = vector.broadcast %4 : vector<8x1xf32> to vector<8x256xf32>
    %6 = arith.addf %3, %5 : vector<8x256xf32>
    %c0_5 = arith.constant 0 : index
    %c0_6 = arith.constant 0 : index
    %7 = vector.load %arg5[%c0_5, %c0_6] : memref<8x256xf32, #tpu.memory_space<vmem>>, vector<8x256xf32>
    tpu.vector_store %arg5[%c0_5, %c0_6], %6 {strides = array<i32>} : memref<8x256xf32, #tpu.memory_space<vmem>>, vector<8x256xf32>,
    return
  }
  func.func @transform_0(%arg0: i32, %arg1: i32) -> (i32, i32) {
    %c0_i32 = arith.constant 0 : i32
    %c0_i32_0 = arith.constant 0 : i32
    return %arg0, %c0_i32 : i32, i32
  }
  func.func @transform_1(%arg0: i32, %arg1: i32) -> (i32, i32) {
    %c0_i32 = arith.constant 0 : i32
    %c0_i32_0 = arith.constant 0 : i32
    return %arg0, %c0_i32 : i32, i32
  }
  func.func @transform_2(%arg0: i32, %arg1: i32) -> (i32, i32) {
    %c0_i32 = arith.constant 0 : i32
    return %arg0, %arg1 : i32, i32
  }
  func.func @transform_3(%arg0: i32, %arg1: i32) -> (i32, i32) {
    %c0_i32 = arith.constant 0 : i32
    return %arg0, %arg1 : i32, i32
  }
}

</mosaic_0001>

<llo_original>
// kernel: tpu_custom_call.1
$region0: #{tpu_custom_call.1}
  #allocation0 [shape = 'u32[]', space=smem, size = 0x4, offset = 0x4, fixed_abs, tag = 'smem constant byte address 0x4 - core index']
  #allocation1 [shape = 'u32[144,128]{1,0:T(1,128)}', space=vmem, size = 0x12000, scoped, tag = 'internal scratch']
  %s0 = inlined_call_operand.vmem [shape: f32[8,1], index: 0, kind: input, shape index: {}]
  %s1 = inlined_call_operand.vmem [shape: f32[8,1], index: 1, kind: input, shape index: {}]
  %s2 = inlined_call_operand.vmem [shape: f32[8,256], index: 2, kind: input, shape index: {}]
  %s3 = inlined_call_operand.hbm [shape: f32[8,256], index: 3, kind: output, shape index: {}]
  %s4 = sld [smem:[#allocation0]]
  $region22: #{tpu_custom_call.1} parent=0
    _
  %s6 = ssub.s32 1, %s4
  %s7 = scalar_select 0, %s6, %s4
  $region1: #{tpu_custom_call.1} parent=0
    #allocation2 [shape = 'u8[8192]{0}', space=vmem, size = 0x2000, scoped, tag = 'output window, operand 0, single buffered']
    #allocation3 [shape = 's32[1]{0}', space=sflag, size = 0x4, scoped, tag = 'scoped memory for tpu_custom_call.1']
    %8 = vsyncpa [#allocation3], 0
    // Predicated region
    $region2: #{tpu_custom_call.1} parent=1 // pred_check
      _
    $region3: #{tpu_custom_call.1} parent=1 // pred_check_branch
      %10 = sbr.rel (0) target = $region5
    $region4: #{tpu_custom_call.1} parent=1 // pred_region
      _
    $region5: #{tpu_custom_call.1} parent=1 // pred_fallthru
      _
    // Predicated region
    $region6: #{tpu_custom_call.1} parent=1 // pred_check
      _
    $region7: #{tpu_custom_call.1} parent=1 // pred_check_branch
      %12 = sbr.rel (0) target = $region9
    $region8: #{tpu_custom_call.1} parent=1 // pred_region
      _
    $region9: #{tpu_custom_call.1} parent=1 // pred_fallthru
      _
    // Predicated region
    $region10: #{tpu_custom_call.1} parent=1 // pred_check
      _
    $region11: #{tpu_custom_call.1} parent=1 // pred_check_branch
      %14 = sbr.rel (0) target = $region13
    $region12: #{tpu_custom_call.1} parent=1 // pred_region
      _
    $region13: #{tpu_custom_call.1} parent=1 // pred_fallthru
      _
    %v15 = vld [vmem:[%s2] sm:$0xff]
    %v16 = vld [vmem:[%s2 + $0x8] sm:$0xff]
    %v17 = vld [vmem:[%s0] sm:$0xff]
    %19 = vset.pattern.permute.xlu0 0
    %20 = vperm.xlu0 %19, %v17
    %v21 = vpop.permute.xlu0 %20
    %v23 = vmul.f32 %v15, %v21
    %v24 = vmul.f32 %v16, %v21
    %v25 = vld [vmem:[%s1] sm:$0xff]
    %27 = vset.pattern.permute.xlu0 0
    %28 = vperm.xlu0 %27, %v25
    %v29 = vpop.permute.xlu0 %28
    %v31 = vadd.f32 %v23, %v29
    %v32 = vadd.f32 %v24, %v29
    %33 = vst [vmem:[#allocation2] sm:$0xff] %v31
    %34 = vst [vmem:[#allocation2 + $0x8] sm:$0xff] %v32
    // Predicated region
    $region14: #{tpu_custom_call.1} parent=1 // pred_check
      _
    $region15: #{tpu_custom_call.1} parent=1 // pred_check_branch
      %36 = sbr.rel (0) target = $region17
    $region16: #{tpu_custom_call.1} parent=1 // pred_region
      %s38 = ssub.s32 256, 256
      %39 = vsyncadd [#allocation3], %s38
      %s41 = sshll.u32 [#allocation2], 4
      %s42 = int_to_ptr.vmem [resolvable:$true] %s41
      %44 = dma.vmem_to_hbm [thread:$0]  %s42, 256, %s3, [#allocation3]
    $region17: #{tpu_custom_call.1} parent=1 // pred_fallthru
      _
    // Predicated region
    $region18: #{tpu_custom_call.1} parent=1 // pred_check
      _
    $region19: #{tpu_custom_call.1} parent=1 // pred_check_branch
      %46 = sbr.rel (0) target = $region21
    $region20: #{tpu_custom_call.1} parent=1 // pred_region
      %47 = dma.done [#allocation3], 256
    $region21: #{tpu_custom_call.1} parent=1 // pred_fallthru
      _
    %48 = vsyncpa [#allocation3], 1

</llo_original>
